<compile_context>
chip_gen: v7x
topology: tpu7x:2x2x1
jax: 0.10.0
libtpu: 0.0.40
codegen_flags: <defaults>
</compile_context>

<pallas_src>
import functools

import jax
import jax.numpy as jnp
from jax.experimental import pallas as pl
from jax.experimental.pallas import tpu as pltpu


def _round_up(n: int, m: int) -> int:
    return ((n + m - 1) // m) * m


def _pack_params(params):
    """Pack [(w (in,out), b (1,out)), ...] into one (rows, 128) f32 slab.

    Layout per layer (rows padded to multiples of 8 for sublane alignment):
        [ W_i  (padded to round8(in_i) rows) ]
        [ b_i  (1 real row, padded to 8)     ]
    Returns (slab, offsets, layer_sizes) where offsets[i] = (w_row, b_row).
    """
    max_out = max(w.shape[1] for w, _ in params)
    lane_w = _round_up(max_out, 128)

    blocks = []
    offsets = []
    row = 0
    for w, b in params:
        in_d, out_d = w.shape
        in_pad = _round_up(in_d, 8)
        w_blk = jnp.zeros((in_pad, lane_w), jnp.float32).at[:in_d, :out_d].set(w)
        b_blk = jnp.zeros((8, lane_w), jnp.float32).at[0:1, :out_d].set(b)
        offsets.append((row, row + in_pad))
        blocks.append(w_blk)
        blocks.append(b_blk)
        row += in_pad + 8

    slab = jnp.concatenate(blocks, axis=0)
    layer_sizes = [params[0][0].shape[0]] + [w.shape[1] for w, _ in params]
    return slab, tuple(offsets), tuple(layer_sizes)


def _make_mlp_q_actor_kernel(layer_sizes, offsets, action_limit, use_bf16_matmul):
    """Kernel: tanh MLP (tanh output activation too), scaled by action_limit."""
    n_layers = len(layer_sizes) - 1

    def kernel(x_ref, p_ref, out_ref):
        h = x_ref[...]  # f32, no redundant cast
        for i in range(n_layers):
            in_d = layer_sizes[i]
            out_d = layer_sizes[i + 1]
            w_row, b_row = offsets[i]
            w = p_ref[w_row:w_row + in_d, 0:out_d]          # static slice (view)
            b = p_ref[b_row:b_row + 1, 0:out_d]             # (1, out_d), f32
            if use_bf16_matmul:
                acc = jnp.dot(h.astype(jnp.bfloat16), w.astype(jnp.bfloat16),
                              preferred_element_type=jnp.float32)
            else:
                acc = jnp.dot(h, w, preferred_element_type=jnp.float32)
            # hidden activation = tanh; final layer out_act = tanh as well.
            # Elementwise math kept in f32 (v5e-safe).
            h = jnp.tanh(acc + b)
        out_ref[...] = (action_limit * h).astype(out_ref.dtype)

    return kernel


def mlp_q_actor_forward(x, params, action_limit, *, batch_tile=512,
                        use_bf16_matmul=False):
    """Run MLPQActor forward.

    x:       [batch, state_features] float32
    params:  list of (w, b), w: (in, out) pre-transposed, b: (1, out)
    returns: [batch, action_dim] float32 scaled to the action limits.
    """
    slab, offsets, layer_sizes = _pack_params(params)
    batch, in_dim = x.shape
    action_dim = layer_sizes[-1]
    kernel = _make_mlp_q_actor_kernel(layer_sizes, offsets,
                                      float(action_limit), use_bf16_matmul)

    if batch <= batch_tile:
        # Single-shot: no grid, no pipeline machinery, whole arrays in VMEM.
        return pl.pallas_call(
            kernel,
            out_shape=jax.ShapeDtypeStruct((batch, action_dim), jnp.float32),
            in_specs=[pl.BlockSpec(memory_space=pltpu.MemorySpace.VMEM),
                      pl.BlockSpec(memory_space=pltpu.MemorySpace.VMEM)],
            out_specs=pl.BlockSpec(memory_space=pltpu.MemorySpace.VMEM),
        )(x, slab)

    # Batch-tiled path: weights stay resident in VMEM across grid iterations,
    # activations are streamed, batch axis is "parallel" (megacore on v7x).
    tb = batch_tile
    padded = pl.cdiv(batch, tb) * tb
    if padded != batch:
        x = jnp.pad(x, ((0, padded - batch), (0, 0)))

    out = pl.pallas_call(
        kernel,
        out_shape=jax.ShapeDtypeStruct((padded, action_dim), jnp.float32),
        grid=(padded // tb,),
        in_specs=[pl.BlockSpec((tb, in_dim), lambda i: (i, 0)),
                  pl.BlockSpec(slab.shape, lambda i: (0, 0))],
        out_specs=pl.BlockSpec((tb, action_dim), lambda i: (i, 0)),
        compiler_params=pltpu.CompilerParams(
            dimension_semantics=("parallel",)),
    )(x, slab)
    return out[:batch]


def _init_params(key, layer_sizes):
    """Deterministic params mimicking torch.nn.Linear default init:
    U(-1/sqrt(fan_in), 1/sqrt(fan_in)) for both weight and bias."""
    params = []
    for i in range(len(layer_sizes) - 1):
        key, kw, kb = jax.random.split(key, 3)
        fan_in, fan_out = layer_sizes[i], layer_sizes[i + 1]
        bound = 1.0 / (fan_in ** 0.5)
        w = jax.random.uniform(kw, (fan_in, fan_out), jnp.float32, -bound, bound)
        b = jax.random.uniform(kb, (1, fan_out), jnp.float32, -bound, bound)
        params.append((w, b))
    return key, params


if __name__ == "__main__":
    # Module-consistent small sizes.
    state_features = 16
    action_dim = 8
    hidden_sizes = (32, 32)
    action_limit = 2.0

    layer_sizes = [state_features] + list(hidden_sizes) + [action_dim]
    key = jax.random.PRNGKey(0)
    key, params = _init_params(key, layer_sizes)

    def ref_fwd(xin):
        h = xin
        for w, b in params:
            h = jnp.tanh(h @ w + b)
        return action_limit * h

    # Path 1: tiny batch -> grid-less single-shot kernel, f32 matmuls.
    key, k1 = jax.random.split(key)
    x_small = jax.random.uniform(k1, (8, state_features), jnp.float32, -1.0, 1.0)
    out_small = jax.block_until_ready(
        mlp_q_actor_forward(x_small, params, action_limit))
    assert out_small.shape == (8, action_dim), out_small.shape
    assert jnp.allclose(out_small, ref_fwd(x_small), atol=1e-5, rtol=1e-5), \
        "small-batch mismatch vs reference"

    # Path 2: larger batch -> batch-tiled grid, resident weights, parallel axis.
    key, k2 = jax.random.split(key)
    x_big = jax.random.uniform(k2, (256, state_features), jnp.float32, -1.0, 1.0)
    out_big = jax.block_until_ready(
        mlp_q_actor_forward(x_big, params, action_limit, batch_tile=128))
    assert out_big.shape == (256, action_dim), out_big.shape
    assert jnp.allclose(out_big, ref_fwd(x_big), atol=1e-5, rtol=1e-5), \
        "tiled-batch mismatch vs reference"

    # Path 3: bf16 MXU inputs (f32 accumulate + f32 elementwise), loose tolerance.
    out_bf16 = jax.block_until_ready(
        mlp_q_actor_forward(x_big, params, action_limit, batch_tile=128,
                            use_bf16_matmul=True))
    assert jnp.allclose(out_bf16, ref_fwd(x_big), atol=5e-2, rtol=5e-2), \
        "bf16-matmul path deviates too much from f32 reference"

    print("KERNEL_OK")
</pallas_src>

<mosaic_0001>
module attributes {stable_mosaic.version = 11 : i64} {
  func.func @kernel(%arg0: memref<8x16xf32, #tpu.memory_space<vmem>>, %arg1: memref<104x128xf32, #tpu.memory_space<vmem>>, %arg2: memref<8x8xf32, #tpu.memory_space<vmem>>) attributes {dimension_semantics = [], scalar_prefetch = 0 : i64, scratch_operands = 0 : i64, tpu.core_type = #tpu.core_type<tc>} {
    %c0 = arith.constant 0 : index
    %c0_0 = arith.constant 0 : index
    %0 = vector.load %arg0[%c0, %c0_0] : memref<8x16xf32, #tpu.memory_space<vmem>>, vector<8x16xf32>
    %c0_1 = arith.constant 0 : index
    %c0_2 = arith.constant 0 : index
    %1 = vector.load %arg1[%c0_1, %c0_2] : memref<104x128xf32, #tpu.memory_space<vmem>>, vector<16x32xf32>
    %c16 = arith.constant 16 : index
    %c0_3 = arith.constant 0 : index
    %2 = vector.load %arg1[%c16, %c0_3] : memref<104x128xf32, #tpu.memory_space<vmem>>, vector<1x32xf32>
    %cst = arith.constant dense<0.000000e+00> : vector<8x32xf32>
    %3 = tpu.matmul %0, %1, %cst {dimension_numbers = #tpu.dot_dimension_numbers<[1], [0], [0], [1], [0, 0, 1, 1], [], []>} : vector<8x16xf32>, vector<16x32xf32>, vector<8x32xf32> -> vector<8x32xf32>
    %4 = vector.broadcast %2 : vector<1x32xf32> to vector<8x32xf32>
    %5 = arith.addf %3, %4 : vector<8x32xf32>
    %6 = math.tanh %5 : vector<8x32xf32>
    %c24 = arith.constant 24 : index
    %c0_4 = arith.constant 0 : index
    %7 = vector.load %arg1[%c24, %c0_4] : memref<104x128xf32, #tpu.memory_space<vmem>>, vector<32x32xf32>
    %c56 = arith.constant 56 : index
    %c0_5 = arith.constant 0 : index
    %8 = vector.load %arg1[%c56, %c0_5] : memref<104x128xf32, #tpu.memory_space<vmem>>, vector<1x32xf32>
    %cst_6 = arith.constant dense<0.000000e+00> : vector<8x32xf32>
    %9 = tpu.matmul %6, %7, %cst_6 {dimension_numbers = #tpu.dot_dimension_numbers<[1], [0], [0], [1], [0, 0, 1, 1], [], []>} : vector<8x32xf32>, vector<32x32xf32>, vector<8x32xf32> -> vector<8x32xf32>
    %10 = vector.broadcast %8 : vector<1x32xf32> to vector<8x32xf32>
    %11 = arith.addf %9, %10 : vector<8x32xf32>
    %12 = math.tanh %11 : vector<8x32xf32>
    %c64 = arith.constant 64 : index
    %c0_7 = arith.constant 0 : index
    %13 = vector.load %arg1[%c64, %c0_7] : memref<104x128xf32, #tpu.memory_space<vmem>>, vector<32x8xf32>
    %c96 = arith.constant 96 : index
    %c0_8 = arith.constant 0 : index
    %14 = vector.load %arg1[%c96, %c0_8] : memref<104x128xf32, #tpu.memory_space<vmem>>, vector<1x8xf32>
    %cst_9 = arith.constant dense<0.000000e+00> : vector<8x8xf32>
    %15 = tpu.matmul %12, %13, %cst_9 {dimension_numbers = #tpu.dot_dimension_numbers<[1], [0], [0], [1], [0, 0, 1, 1], [], []>} : vector<8x32xf32>, vector<32x8xf32>, vector<8x8xf32> -> vector<8x8xf32>
    %16 = vector.broadcast %14 : vector<1x8xf32> to vector<8x8xf32>
    %17 = arith.addf %15, %16 : vector<8x8xf32>
    %18 = math.tanh %17 : vector<8x8xf32>
    %cst_10 = arith.constant 2.000000e+00 : f32
    %19 = vector.broadcast %cst_10 : f32 to vector<8x8xf32>
    %20 = arith.mulf %19, %18 : vector<8x8xf32>
    %c0_11 = arith.constant 0 : index
    %c0_12 = arith.constant 0 : index
    %21 = vector.load %arg2[%c0_11, %c0_12] : memref<8x8xf32, #tpu.memory_space<vmem>>, vector<8x8xf32>
    tpu.vector_store %arg2[%c0_11, %c0_12], %20 {strides = array<i32>} : memref<8x8xf32, #tpu.memory_space<vmem>>, vector<8x8xf32>,
    return
  }
}

</mosaic_0001>

<llo_original>
// kernel: tpu_custom_call.1
$region0: #{tpu_custom_call.1}
  #allocation0 [shape = 'u32[]', space=smem, size = 0x4, offset = 0x4, fixed_abs, tag = 'smem constant byte address 0x4 - core index']
  #allocation1 [shape = 'u32[144,128]{1,0:T(1,128)}', space=vmem, size = 0x12000, scoped, tag = 'internal scratch']
  %s0 = inlined_call_operand.hbm [shape: f32[8,16], index: 0, kind: input, shape index: {}]
  %s1 = inlined_call_operand.hbm [shape: f32[104,128], index: 1, kind: input, shape index: {}]
  %s2 = inlined_call_operand.hbm [shape: f32[8,8], index: 2, kind: output, shape index: {}]
  %s3 = sld [smem:[#allocation0]]
  $region26: #{tpu_custom_call.1} parent=0
    _
  %s5 = ssub.s32 1, %s3
  %s6 = scalar_select 0, %s5, %s3
  $region1: #{tpu_custom_call.1} parent=0
    #allocation2 [shape = 'u8[4096]{0}', space=vmem, size = 0x1000, scoped, tag = 'input window, operand 0, single buffered']
    #allocation3 [shape = 's32[1]{0}', space=sflag, size = 0x4, scoped, tag = 'scoped memory for tpu_custom_call.1']
    #allocation4 [shape = 's32[1]{0}', space=sflag, size = 0x4, scoped, tag = 'scoped memory for tpu_custom_call.1']
    #allocation5 [shape = 'u8[53248]{0}', space=vmem, size = 0xd000, scoped, tag = 'input window, operand 1, single buffered']
    #allocation6 [shape = 's32[1]{0}', space=sflag, size = 0x4, scoped, tag = 'scoped memory for tpu_custom_call.1']
    #allocation7 [shape = 'u8[4096]{0}', space=vmem, size = 0x1000, scoped, tag = 'output window, operand 0, single buffered']
    %7 = vsyncpa [#allocation3], 0
    %8 = vsyncpa [#allocation6], 0
    %9 = vsyncpa [#allocation4], 0
    // Predicated region
    $region2: #{tpu_custom_call.1} parent=1 // pred_check
      _
    $region3: #{tpu_custom_call.1} parent=1 // pred_check_branch
      %11 = sbr.rel (0) target = $region5
    $region4: #{tpu_custom_call.1} parent=1 // pred_region
      %s13 = ssub.s32 128, 128
      %14 = vsyncadd [#allocation3], %s13
      %s16 = sshll.u32 [#allocation2], 4
      %s17 = int_to_ptr.vmem [resolvable:$true] %s16
      %19 = dma.hbm_to_vmem [thread:$0]  %s0, 128, %s17, [#allocation3]
    $region5: #{tpu_custom_call.1} parent=1 // pred_fallthru
      _
    // Predicated region
    $region6: #{tpu_custom_call.1} parent=1 // pred_check
      _
    $region7: #{tpu_custom_call.1} parent=1 // pred_check_branch
      %21 = sbr.rel (0) target = $region9
    $region8: #{tpu_custom_call.1} parent=1 // pred_region
      %s23 = ssub.s32 1664, 1664
      %24 = vsyncadd [#allocation6], %s23
      %s25 = sshll.u32 [#allocation5], 4
      %s26 = int_to_ptr.vmem [resolvable:$true] %s25
      %31 = dma.hbm_to_vmem [thread:$0]  %s1, 1664, %s26, [#allocation6], 128, 128, 8
    $region9: #{tpu_custom_call.1} parent=1 // pred_fallthru
      _
    // Predicated region
    $region10: #{tpu_custom_call.1} parent=1 // pred_check
      _
    $region11: #{tpu_custom_call.1} parent=1 // pred_check_branch
      %33 = sbr.rel (0) target = $region13
    $region12: #{tpu_custom_call.1} parent=1 // pred_region
      %34 = dma.done [#allocation3], 128
    $region13: #{tpu_custom_call.1} parent=1 // pred_fallthru
      _
    // Predicated region
    $region14: #{tpu_custom_call.1} parent=1 // pred_check
      _
    $region15: #{tpu_custom_call.1} parent=1 // pred_check_branch
      %36 = sbr.rel (0) target = $region17
    $region16: #{tpu_custom_call.1} parent=1 // pred_region
      %37 = dma.done [#allocation6], 1664
    $region17: #{tpu_custom_call.1} parent=1 // pred_fallthru
      _
    %v38 = vld [vmem:[#allocation2] sm:$0xff]
    %v39 = vld [vmem:[#allocation5] sm:$0xff]
    %v40 = vld [vmem:[#allocation5 + $0x8] sm:$0xff]
    %v41 = vld [vmem:[#allocation5 + $0x10] sm:$0x1]
    %v42 = vlaneseq
    %v43 = vshrl.u32 %v42, 7
    %v44 = vsub.s32 0, %v43
    %v45 = vrot.slane %v41, %v44
    %vm46 = vcmask 130048
    %v48 = vsel %vm46, %v38, 0
    %50 = vmatprep.subr.mxu0 0.0
    %51 = vmatpush1.msra.mxu0 %v39
    %52 = vmatprep.subr.mxu0 0.0
    %53 = vmatpush1.msra.mxu0 %v40
    %54 = vmatprep.subr.mxu0 0.0
    %55 = vmatpush1.msra.mxu0 0.0
    %56 = vmatprep.subr.mxu0 0.0
    %57 = vmatpush1.msra.mxu0 0.0
    %58 = vmatprep.subr.mxu0 0.0
    %59 = vmatpush1.msra.mxu0 0.0
    %60 = vmatprep.subr.mxu0 0.0
    %61 = vmatpush1.msra.mxu0 0.0
    %62 = vmatprep.subr.mxu0 0.0
    %63 = vmatpush1.msra.mxu0 0.0
    %64 = vmatprep.subr.mxu0 0.0
    %65 = vmatpush1.msra.mxu0 0.0
    %66 = vmatprep.subr.mxu0 0.0
    %67 = vmatpush1.msra.mxu0 0.0
    %68 = vmatprep.subr.mxu0 0.0
    %69 = vmatpush1.msra.mxu0 0.0
    %70 = vmatprep.subr.mxu0 0.0
    %71 = vmatpush1.msra.mxu0 0.0
    %72 = vmatprep.subr.mxu0 0.0
    %73 = vmatpush1.msra.mxu0 0.0
    %74 = vmatprep.subr.mxu0 0.0
    %75 = vmatpush1.msra.mxu0 0.0
    %76 = vmatprep.subr.mxu0 0.0
    %77 = vmatpush1.msra.mxu0 0.0
    %78 = vmatprep.subr.mxu0 0.0
    %79 = vmatpush1.msra.mxu0 0.0
    %80 = vmatprep.subr.mxu0 0.0
    %81 = vmatpush1.msra.mxu0 0.0
    %82 = vmatprep.subr.mxu0 0.0
    %83 = vmatpush1.msra.mxu0 0.0
    %84 = vmatprep.subr.mxu0 0.0
    %85 = vmatpush1.msra.mxu0 0.0
    %86 = vmatprep.subr.mxu0 0.0
    %87 = vmatpush1.msra.mxu0 0.0
    %88 = vmatprep.subr.mxu0 0.0
    %89 = vmatpush1.msra.mxu0 0.0
    %90 = vmatprep.subr.mxu0 0.0
    %91 = vmatpush1.msra.mxu0 0.0
    %92 = vmatprep.subr.mxu0 0.0
    %93 = vmatpush1.msra.mxu0 0.0
    %94 = vmatprep.subr.mxu0 0.0
    %95 = vmatpush1.msra.mxu0 0.0
    %96 = vmatprep.subr.mxu0 0.0
    %97 = vmatpush1.msra.mxu0 0.0
    %98 = vmatprep.subr.mxu0 0.0
    %99 = vmatpush1.msra.mxu0 0.0
    %100 = vmatprep.subr.mxu0 0.0
    %101 = vmatpush1.msra.mxu0 0.0
    %102 = vmatprep.subr.mxu0 0.0
    %103 = vmatpush1.msra.mxu0 0.0
    %104 = vmatprep.subr.mxu0 0.0
    %105 = vmatpush1.msra.mxu0 0.0
    %106 = vmatprep.subr.mxu0 0.0
    %107 = vmatpush1.msra.mxu0 0.0
    %108 = vmatprep.subr.mxu0 0.0
    %109 = vmatpush1.msra.mxu0 0.0
    %110 = vmatprep.subr.mxu0 0.0
    %111 = vmatpush1.msra.mxu0 0.0
    %112 = vmatprep.subr.mxu0 0.0
    %113 = vmatpush1.msra.mxu0 0.0
    %114 = vmatprep.mubr.f32.mxu0 0.0
    %115 = vmatmul.mubr.f32.gmra.mrb[0].mxu0 %v48
    %v116 = vpop.f32.mrb[0].mxu0
    %v117 = vadd.f32 %v45, %v116
    %v118 = vpop.f32.mrb[0].mxu0
    %119 = vdwg.mxu0
    %v120 = vtanh.pop %v117
    %v121 = vld [vmem:[#allocation5 + $0x18] sm:$0xff]
    %v122 = vld [vmem:[#allocation5 + $0x20] sm:$0xff]
    %v123 = vld [vmem:[#allocation5 + $0x28] sm:$0xff]
    %v124 = vld [vmem:[#allocation5 + $0x30] sm:$0xff]
    %v125 = vld [vmem:[#allocation5 + $0x38] sm:$0x1]
    %v126 = vlaneseq
    %v127 = vshrl.u32 %v126, 7
    %v128 = vsub.s32 0, %v127
    %v129 = vrot.slane %v125, %v128
    %vm130 = vcmask 261120
    %v132 = vsel %vm130, %v120, 0
    %134 = vmatprep.subr.mxu0 0.0
    %135 = vmatpush1.msra.mxu0 %v121
    %136 = vmatprep.subr.mxu0 0.0
    %137 = vmatpush1.msra.mxu0 %v122
    %138 = vmatprep.subr.mxu0 0.0
    %139 = vmatpush1.msra.mxu0 %v123
    %140 = vmatprep.subr.mxu0 0.0
    %141 = vmatpush1.msra.mxu0 %v124
    %142 = vmatprep.subr.mxu0 0.0
    %143 = vmatpush1.msra.mxu0 0.0
    %144 = vmatprep.subr.mxu0 0.0
    %145 = vmatpush1.msra.mxu0 0.0
    %146 = vmatprep.subr.mxu0 0.0
    %147 = vmatpush1.msra.mxu0 0.0
    %148 = vmatprep.subr.mxu0 0.0
    %149 = vmatpush1.msra.mxu0 0.0
    %150 = vmatprep.subr.mxu0 0.0
    %151 = vmatpush1.msra.mxu0 0.0
    %152 = vmatprep.subr.mxu0 0.0
    %153 = vmatpush1.msra.mxu0 0.0
    %154 = vmatprep.subr.mxu0 0.0
    %155 = vmatpush1.msra.mxu0 0.0
    %156 = vmatprep.subr.mxu0 0.0
    %157 = vmatpush1.msra.mxu0 0.0
    %158 = vmatprep.subr.mxu0 0.0
    %159 = vmatpush1.msra.mxu0 0.0
    %160 = vmatprep.subr.mxu0 0.0
    %161 = vmatpush1.msra.mxu0 0.0
    %162 = vmatprep.subr.mxu0 0.0
    %163 = vmatpush1.msra.mxu0 0.0
    %164 = vmatprep.subr.mxu0 0.0
    %165 = vmatpush1.msra.mxu0 0.0
    %166 = vmatprep.subr.mxu0 0.0
    %167 = vmatpush1.msra.mxu0 0.0
    %168 = vmatprep.subr.mxu0 0.0
    %169 = vmatpush1.msra.mxu0 0.0
    %170 = vmatprep.subr.mxu0 0.0
    %171 = vmatpush1.msra.mxu0 0.0
    %172 = vmatprep.subr.mxu0 0.0
    %173 = vmatpush1.msra.mxu0 0.0
    %174 = vmatprep.subr.mxu0 0.0
    %175 = vmatpush1.msra.mxu0 0.0
    %176 = vmatprep.subr.mxu0 0.0
    %177 = vmatpush1.msra.mxu0 0.0
    %178 = vmatprep.subr.mxu0 0.0
    %179 = vmatpush1.msra.mxu0 0.0
    %180 = vmatprep.subr.mxu0 0.0
    %181 = vmatpush1.msra.mxu0 0.0
    %182 = vmatprep.subr.mxu0 0.0
    %183 = vmatpush1.msra.mxu0 0.0
    %184 = vmatprep.subr.mxu0 0.0
    %185 = vmatpush1.msra.mxu0 0.0
    %186 = vmatprep.subr.mxu0 0.0
    %187 = vmatpush1.msra.mxu0 0.0
    %188 = vmatprep.subr.mxu0 0.0
    %189 = vmatpush1.msra.mxu0 0.0
    %190 = vmatprep.subr.mxu0 0.0
    %191 = vmatpush1.msra.mxu0 0.0
    %192 = vmatprep.subr.mxu0 0.0
    %193 = vmatpush1.msra.mxu0 0.0
    %194 = vmatprep.subr.mxu0 0.0
    %195 = vmatpush1.msra.mxu0 0.0
    %196 = vmatprep.subr.mxu0 0.0
    %197 = vmatpush1.msra.mxu0 0.0
    %198 = vmatprep.mubr.f32.mxu0 0.0
    %199 = vmatmul.mubr.f32.gmra.mrb[0].mxu0 %v132
    %v200 = vpop.f32.mrb[0].mxu0
    %v201 = vadd.f32 %v129, %v200
    %v202 = vpop.f32.mrb[0].mxu0
    %203 = vdwg.mxu0
    %v204 = vtanh.pop %v201
    %v205 = vld [vmem:[#allocation5 + $0x40] sm:$0xff]
    %v206 = vld [vmem:[#allocation5 + $0x48] sm:$0xff]
    %v207 = vld [vmem:[#allocation5 + $0x50] sm:$0xff]
    %v208 = vld [vmem:[#allocation5 + $0x58] sm:$0xff]
    %v209 = vld [vmem:[#allocation5 + $0x60] sm:$0x1]
    %v210 = vlaneseq
    %v211 = vshrl.u32 %v210, 7
    %v212 = vsub.s32 0, %v211
    %v213 = vrot.slane %v209, %v212
    %v215 = vsel %vm130, %v204, 0
    %217 = vmatprep.subr.mxu0 0.0
    %218 = vmatpush1.msra.mxu0 %v205
    %219 = vmatprep.subr.mxu0 0.0
    %220 = vmatpush1.msra.mxu0 %v206
    %221 = vmatprep.subr.mxu0 0.0
    %222 = vmatpush1.msra.mxu0 %v207
    %223 = vmatprep.subr.mxu0 0.0
    %224 = vmatpush1.msra.mxu0 %v208
    %225 = vmatprep.subr.mxu0 0.0
    %226 = vmatpush1.msra.mxu0 0.0
    %227 = vmatprep.subr.mxu0 0.0
    %228 = vmatpush1.msra.mxu0 0.0
    %229 = vmatprep.subr.mxu0 0.0
    %230 = vmatpush1.msra.mxu0 0.0
    %231 = vmatprep.subr.mxu0 0.0
    %232 = vmatpush1.msra.mxu0 0.0
    %233 = vmatprep.subr.mxu0 0.0
    %234 = vmatpush1.msra.mxu0 0.0
    %235 = vmatprep.subr.mxu0 0.0
    %236 = vmatpush1.msra.mxu0 0.0
    %237 = vmatprep.subr.mxu0 0.0
    %238 = vmatpush1.msra.mxu0 0.0
    %239 = vmatprep.subr.mxu0 0.0
    %240 = vmatpush1.msra.mxu0 0.0
    %241 = vmatprep.subr.mxu0 0.0
    %242 = vmatpush1.msra.mxu0 0.0
    %243 = vmatprep.subr.mxu0 0.0
    %244 = vmatpush1.msra.mxu0 0.0
    %245 = vmatprep.subr.mxu0 0.0
    %246 = vmatpush1.msra.mxu0 0.0
    %247 = vmatprep.subr.mxu0 0.0
    %248 = vmatpush1.msra.mxu0 0.0
    %249 = vmatprep.subr.mxu0 0.0
    %250 = vmatpush1.msra.mxu0 0.0
    %251 = vmatprep.subr.mxu0 0.0
    %252 = vmatpush1.msra.mxu0 0.0
    %253 = vmatprep.subr.mxu0 0.0
    %254 = vmatpush1.msra.mxu0 0.0
    %255 = vmatprep.subr.mxu0 0.0
    %256 = vmatpush1.msra.mxu0 0.0
    %257 = vmatprep.subr.mxu0 0.0
    %258 = vmatpush1.msra.mxu0 0.0
    %259 = vmatprep.subr.mxu0 0.0
    %260 = vmatpush1.msra.mxu0 0.0
    %261 = vmatprep.subr.mxu0 0.0
    %262 = vmatpush1.msra.mxu0 0.0
    %263 = vmatprep.subr.mxu0 0.0
    %264 = vmatpush1.msra.mxu0 0.0
    %265 = vmatprep.subr.mxu0 0.0
    %266 = vmatpush1.msra.mxu0 0.0
    %267 = vmatprep.subr.mxu0 0.0
    %268 = vmatpush1.msra.mxu0 0.0
    %269 = vmatprep.subr.mxu0 0.0
    %270 = vmatpush1.msra.mxu0 0.0
    %271 = vmatprep.subr.mxu0 0.0
    %272 = vmatpush1.msra.mxu0 0.0
    %273 = vmatprep.subr.mxu0 0.0
    %274 = vmatpush1.msra.mxu0 0.0
    %275 = vmatprep.subr.mxu0 0.0
    %276 = vmatpush1.msra.mxu0 0.0
    %277 = vmatprep.subr.mxu0 0.0
    %278 = vmatpush1.msra.mxu0 0.0
    %279 = vmatprep.subr.mxu0 0.0
    %280 = vmatpush1.msra.mxu0 0.0
    %281 = vmatprep.mubr.f32.mxu0 0.0
    %282 = vmatmul.mubr.f32.gmra.mrb[0].mxu0 %v215
    %v283 = vpop.f32.mrb[0].mxu0
    %v284 = vadd.f32 %v213, %v283
    %v285 = vpop.f32.mrb[0].mxu0
    %286 = vdwg.mxu0
    %v287 = vtanh.pop %v284
    %v288 = vmul.f32 %v287, 2.0
    %vm289 = vcmask 64512
    %290 = vst.msk [vmem:[#allocation7] sm:$0xff] %vm289, %v288
    // Predicated region
    $region18: #{tpu_custom_call.1} parent=1 // pred_check
      _
    $region19: #{tpu_custom_call.1} parent=1 // pred_check_branch
      %292 = sbr.rel (0) target = $region21
    $region20: #{tpu_custom_call.1} parent=1 // pred_region
      %s294 = ssub.s32 128, 128
      %295 = vsyncadd [#allocation4], %s294
      %s297 = sshll.u32 [#allocation7], 4
      %s298 = int_to_ptr.vmem [resolvable:$true] %s297
      %300 = dma.vmem_to_hbm [thread:$0]  %s298, 128, %s2, [#allocation4]
    $region21: #{tpu_custom_call.1} parent=1 // pred_fallthru
      _
    // Predicated region
    $region22: #{tpu_custom_call.1} parent=1 // pred_check
      _
    $region23: #{tpu_custom_call.1} parent=1 // pred_check_branch
      %302 = sbr.rel (0) target = $region25
    $region24: #{tpu_custom_call.1} parent=1 // pred_region
      %303 = dma.done [#allocation4], 128
    $region25: #{tpu_custom_call.1} parent=1 // pred_fallthru
      _
    %304 = vsyncpa [#allocation3], 1
    %305 = vsyncpa [#allocation6], 1
    %306 = vsyncpa [#allocation4], 1

</llo_original>
